<compile_context>
chip_gen: v6e
topology: v6e:2x2x1
jax: 0.10.0
libtpu: 0.0.40
codegen_flags: <defaults>
</compile_context>

<pallas_src>
import jax
import jax.numpy as jnp
from jax.experimental import pallas as pl
from jax.experimental.pallas import tpu as pltpu

_LANE = 128
_MIN_STEPS = 4                       # keep the DMA pipeline busy / both v7x TCs fed
_MIN_STEPS_BYTES = 2 * 1024 * 1024   # only enforce the minimum step count above ~2 MiB


def _swish_kernel(x_ref, o_ref):
    x = x_ref[...]
    # Exact sigmoid: exp goes to the EUP, mul/add to the VPU.  On v5e/v6e the kernel
    # is HBM-bound so compute is free filler.  (On v7x f32 the EUP can become the
    # binding slot; a single-transcendental 0.5*(tanh(0.5*x)+1) form would halve EUP
    # pushes, but the HW tanh approximation risks the 1e-6 f32 tolerance, so we keep
    # the exact form.)
    o_ref[...] = x * jax.nn.sigmoid(x)


def _choose_layout(n_flat: int, itemsize: int, target_block_bytes: int):
    """Pick a lane-dense 2D slab (rows, W) and a row-tile size for the 1-D grid."""
    sublane = 16 if itemsize == 2 else 8   # bf16 packs 16 rows per vreg, f32 packs 8

    # Widest lane width (multiple of 128) that divides the flat length.
    W = _LANE
    for cand in (4096, 2048, 1024, 512, 256, 128):
        if n_flat % cand == 0:
            W = cand
            break
    rows = n_flat // W

    # Largest tile_rows (multiple of sublane) whose block fits the byte target.
    max_tile_rows = max(
        sublane, (target_block_bytes // (W * itemsize)) // sublane * sublane
    )

    # Never collapse mid/large arrays into 1-2 giant blocks: >= _MIN_STEPS grid steps
    # keeps DMA-in / compute / DMA-out overlapped and gives each v7x TensorCore its
    # own share of the ("parallel",) grid axis.
    if n_flat * itemsize > _MIN_STEPS_BYTES:
        cap = (rows // _MIN_STEPS) // sublane * sublane
        if cap >= sublane:
            max_tile_rows = min(max_tile_rows, cap)

    if rows <= max_tile_rows:
        return W, rows, rows           # single full-extent block (always legal)

    # Prefer an exact divisor of `rows`, but only if it keeps blocks large
    # (>= 75% of max_tile_rows).  Otherwise keep the big tile and let Pallas mask
    # the ragged last block -- far cheaper than many tiny exact-divisor steps.
    tile_rows = max_tile_rows
    t = max_tile_rows
    while t >= sublane:
        if rows % t == 0:
            if 4 * t >= 3 * max_tile_rows:
                tile_rows = t
            break
        t -= sublane
    return W, rows, tile_rows


def _swish_2d(x2d: jax.Array, tile_rows: int) -> jax.Array:
    rows, W = x2d.shape
    grid = (pl.cdiv(rows, tile_rows),)
    return pl.pallas_call(
        _swish_kernel,
        out_shape=jax.ShapeDtypeStruct((rows, W), x2d.dtype),
        grid_spec=pltpu.PrefetchScalarGridSpec(
            num_scalar_prefetch=0,
            grid=grid,
            in_specs=[pl.BlockSpec((tile_rows, W), lambda i: (i, 0))],
            out_specs=pl.BlockSpec((tile_rows, W), lambda i: (i, 0)),
        ),
        compiler_params=pltpu.CompilerParams(
            # "parallel" lets the runtime shard the row axis across v7x's 2 TCs.
            # If a profile shows only one TC active, switch this axis to
            # pltpu.CORE_PARALLEL (or pl.core_map over a tensorcore mesh).
            dimension_semantics=("parallel",),
            # 2 input + 2 output double-buffers at <= 8 MiB blocks = 32 MiB;
            # 48 MiB leaves headroom while staying inside v7x's 64 MiB VMEM.
            vmem_limit_bytes=48 * 1024 * 1024,
        ),
    )(x2d)


def swish(x: jax.Array, *, target_block_bytes: int = 8 * 1024 * 1024) -> jax.Array:
    """Elementwise swish (x * sigmoid(x)) via Pallas. Floating dtypes only."""
    if not jnp.issubdtype(x.dtype, jnp.floating):
        raise TypeError(f"swish requires a floating dtype, got {x.dtype}")

    orig_shape = x.shape
    itemsize = jnp.dtype(x.dtype).itemsize
    n = x.size
    flat = jnp.ravel(x)

    n_aligned = (n // _LANE) * _LANE

    if n_aligned == n:
        # Common path (typical NCHW activations): no pad, no wrapper-side copies.
        W, rows, tile_rows = _choose_layout(n, itemsize, target_block_bytes)
        out2d = _swish_2d(flat.reshape(rows, W), tile_rows)
        return out2d.reshape(orig_shape)

    if n_aligned == 0:
        # Tiny array (< 128 elements): not worth a kernel launch.
        return (flat * jax.nn.sigmoid(flat)).reshape(orig_shape)

    # Ragged path: Pallas handles the 128-aligned prefix, plain jnp the < 128-element
    # tail.  No full-array pad-concatenate on the input and no [:n] slice on the
    # output (each of those was a full extra HBM copy).
    head = flat[:n_aligned]
    tail = flat[n_aligned:]
    W, rows, tile_rows = _choose_layout(n_aligned, itemsize, target_block_bytes)
    out_head = _swish_2d(head.reshape(rows, W), tile_rows).reshape(-1)
    out_tail = tail * jax.nn.sigmoid(tail)
    return jnp.concatenate([out_head, out_tail]).reshape(orig_shape)


if __name__ == "__main__":
    key = jax.random.PRNGKey(0)

    # NCHW activation-style input: batch=2, channels=4, 16x16 spatial
    x = jax.random.normal(key, (2, 4, 16, 16), dtype=jnp.float32)
    y = jax.block_until_ready(swish(x))
    y_ref = x * jax.nn.sigmoid(x)
    assert y.shape == x.shape and y.dtype == x.dtype
    assert jnp.max(jnp.abs(y - y_ref)) < 1e-6

    # Larger input: exercises the multi-step grid and the masked ragged last block
    # (rows = 162, tile_rows = 40 -> 5 steps, last block partial).
    x_big = jax.random.normal(jax.random.PRNGKey(3), (4, 8, 144, 144), dtype=jnp.float32)
    y_big = jax.block_until_ready(swish(x_big))
    assert jnp.max(jnp.abs(y_big - x_big * jax.nn.sigmoid(x_big))) < 1e-6

    # Ragged flat length: Pallas runs the 128-aligned prefix, jnp the <128-elem tail
    x_odd = jax.random.normal(jax.random.PRNGKey(1), (3, 5, 77), dtype=jnp.float32)
    y_odd = jax.block_until_ready(swish(x_odd))
    assert y_odd.shape == x_odd.shape
    assert jnp.max(jnp.abs(y_odd - x_odd * jax.nn.sigmoid(x_odd))) < 1e-6

    # bf16 path (16-row sublane packing handled by the layout chooser)
    x_bf = jax.random.normal(jax.random.PRNGKey(2), (2, 4, 16, 16), dtype=jnp.bfloat16)
    y_bf = jax.block_until_ready(swish(x_bf))
    ref_bf = (
        x_bf.astype(jnp.float32) * jax.nn.sigmoid(x_bf.astype(jnp.float32))
    ).astype(jnp.bfloat16)
    assert y_bf.dtype == jnp.bfloat16
    assert (
        jnp.max(jnp.abs(y_bf.astype(jnp.float32) - ref_bf.astype(jnp.float32))) < 2e-2
    )

    print("KERNEL_OK")
</pallas_src>

<mosaic_0001>
module attributes {stable_mosaic.version = 11 : i64} {
  func.func @_swish_kernel(%arg0: i32, %arg1: memref<1x2048xf32, #tpu.memory_space<vmem>>, %arg2: memref<1x2048xf32, #tpu.memory_space<vmem>>) attributes {dimension_semantics = [#tpu.dimension_semantics<parallel>], iteration_bounds = array<i64: 1>, scalar_prefetch = 0 : i64, scratch_operands = 0 : i64, tpu.core_type = #tpu.core_type<tc>, window_params = [{transform_indices = @transform_0, window_bounds = array<i64: 1, 2048>}, {transform_indices = @transform_1, window_bounds = array<i64: 1, 2048>}]} {
    %c0 = arith.constant 0 : index
    %c0_0 = arith.constant 0 : index
    %0 = vector.load %arg1[%c0, %c0_0] : memref<1x2048xf32, #tpu.memory_space<vmem>>, vector<1x2048xf32>
    %1 = arith.negf %0 : vector<1x2048xf32>
    %2 = math.exp %1 : vector<1x2048xf32>
    %cst = arith.constant 1.000000e+00 : f32
    %3 = vector.broadcast %cst : f32 to vector<1x2048xf32>
    %4 = arith.addf %3, %2 : vector<1x2048xf32>
    %5 = arith.divf %3, %4 : vector<1x2048xf32>
    %6 = arith.mulf %0, %5 : vector<1x2048xf32>
    %c0_1 = arith.constant 0 : index
    %c0_2 = arith.constant 0 : index
    %7 = vector.load %arg2[%c0_1, %c0_2] : memref<1x2048xf32, #tpu.memory_space<vmem>>, vector<1x2048xf32>
    tpu.vector_store %arg2[%c0_1, %c0_2], %6 {strides = array<i32>} : memref<1x2048xf32, #tpu.memory_space<vmem>>, vector<1x2048xf32>,
    return
  }
  func.func @transform_0(%arg0: i32) -> (i32, i32) {
    %c0_i32 = arith.constant 0 : i32
    %c0_i32_0 = arith.constant 0 : i32
    return %arg0, %c0_i32 : i32, i32
  }
  func.func @transform_1(%arg0: i32) -> (i32, i32) {
    %c0_i32 = arith.constant 0 : i32
    %c0_i32_0 = arith.constant 0 : i32
    return %arg0, %c0_i32 : i32, i32
  }
}

</mosaic_0001>

<llo_original>
// kernel: tpu_custom_call.1
$region0: #{tpu_custom_call.1}
  #allocation0 [shape = 'u32[]', space=smem, size = 0x4, offset = 0x4, fixed_abs, tag = 'smem constant byte address 0x4 - core index']
  #allocation1 [shape = 'u32[144,128]{1,0:T(1,128)}', space=vmem, size = 0x12000, scoped, tag = 'internal scratch']
  %s0 = inlined_call_operand.hbm [shape: f32[1,2048], index: 0, kind: input, shape index: {}]
  %s1 = inlined_call_operand.hbm [shape: f32[1,2048], index: 1, kind: output, shape index: {}]
  %s2 = sld [smem:[#allocation0]]
  $region18: #{tpu_custom_call.1} parent=0
    _
  %s4 = ssub.s32 1, %s2
  %s5 = scalar_select 0, %s4, %s2
  $region1: #{tpu_custom_call.1} parent=0
    #allocation2 [shape = 'u8[8192]{0}', space=vmem, size = 0x2000, scoped, tag = 'input window, operand 0, single buffered']
    #allocation3 [shape = 's32[1]{0}', space=sflag, size = 0x4, scoped, tag = 'scoped memory for tpu_custom_call.1']
    #allocation4 [shape = 's32[1]{0}', space=sflag, size = 0x4, scoped, tag = 'scoped memory for tpu_custom_call.1']
    #allocation5 [shape = 'u8[8192]{0}', space=vmem, size = 0x2000, scoped, tag = 'output window, operand 0, single buffered']
    %6 = vsyncpa [#allocation3], 0
    %7 = vsyncpa [#allocation4], 0
    // Predicated region
    $region2: #{tpu_custom_call.1} parent=1 // pred_check
      _
    $region3: #{tpu_custom_call.1} parent=1 // pred_check_branch
      %9 = sbr.rel (0) target = $region5
    $region4: #{tpu_custom_call.1} parent=1 // pred_region
      %s11 = ssub.s32 256, 256
      %12 = vsyncadd [#allocation3], %s11
      %s14 = sshll.u32 [#allocation2], 4
      %s15 = int_to_ptr.vmem [resolvable:$true] %s14
      %17 = dma.hbm_to_vmem [thread:$0]  %s0, 256, %s15, [#allocation3]
    $region5: #{tpu_custom_call.1} parent=1 // pred_fallthru
      _
    // Predicated region
    $region6: #{tpu_custom_call.1} parent=1 // pred_check
      _
    $region7: #{tpu_custom_call.1} parent=1 // pred_check_branch
      %19 = sbr.rel (0) target = $region9
    $region8: #{tpu_custom_call.1} parent=1 // pred_region
      %20 = dma.done [#allocation3], 256
    $region9: #{tpu_custom_call.1} parent=1 // pred_fallthru
      _
    %v21 = vld [vmem:[#allocation2] sm:$0xff]
    %v22 = vld [vmem:[#allocation2 + $0x8] sm:$0xff]
    %v23 = vxor.u32 %v21, 2147483648
    %v24 = vxor.u32 %v22, 2147483648
    %v25 = vmul.f32 %v23, 1.442695
    %v26 = vpow.pop %v25
    %v27 = vmul.f32 %v24, 1.442695
    %v28 = vpow.pop %v27
    %v29 = vadd.f32 %v26, 1.0
    %v30 = vadd.f32 %v28, 1.0
    %v31 = vrcp.pop %v29
    %v32 = vmul.f32 1.0, %v31
    %v33 = vrcp.pop %v30
    %v34 = vmul.f32 1.0, %v33
    %v35 = vmul.f32 %v21, %v32
    %v36 = vmul.f32 %v22, %v34
    %37 = vst [vmem:[#allocation5] sm:$0xff] %v35
    %38 = vst [vmem:[#allocation5 + $0x8] sm:$0xff] %v36
    // Predicated region
    $region10: #{tpu_custom_call.1} parent=1 // pred_check
      _
    $region11: #{tpu_custom_call.1} parent=1 // pred_check_branch
      %40 = sbr.rel (0) target = $region13
    $region12: #{tpu_custom_call.1} parent=1 // pred_region
      %s42 = ssub.s32 256, 256
      %43 = vsyncadd [#allocation4], %s42
      %s45 = sshll.u32 [#allocation5], 4
      %s46 = int_to_ptr.vmem [resolvable:$true] %s45
      %48 = dma.vmem_to_hbm [thread:$0]  %s46, 256, %s1, [#allocation4]
    $region13: #{tpu_custom_call.1} parent=1 // pred_fallthru
      _
    // Predicated region
    $region14: #{tpu_custom_call.1} parent=1 // pred_check
      _
    $region15: #{tpu_custom_call.1} parent=1 // pred_check_branch
      %50 = sbr.rel (0) target = $region17
    $region16: #{tpu_custom_call.1} parent=1 // pred_region
      %51 = dma.done [#allocation4], 256
    $region17: #{tpu_custom_call.1} parent=1 // pred_fallthru
      _
    %52 = vsyncpa [#allocation3], 1
    %53 = vsyncpa [#allocation4], 1

</llo_original>
